<compile_context>
chip_gen: v5e
topology: v5e:2x2
jax: 0.10.0
libtpu: 0.0.40
codegen_flags: <defaults>
</compile_context>

<pallas_src>
import functools

import jax
import jax.numpy as jnp
from jax.experimental import pallas as pl
from jax.experimental.pallas import tpu as pltpu


def _round_up(x, m):
    return ((x + m - 1) // m) * m


def _head_kernel(z_ref, w_ref, b_ref, o_ref):
    # (tile, 64F) @ (64F, 3F) + (1, 3F) -> (tile, 3F), f32 accumulation on MXU.
    acc = jnp.dot(z_ref[...], w_ref[...], preferred_element_type=jnp.float32)
    o_ref[...] = (acc + b_ref[...]).astype(o_ref.dtype)


@functools.partial(jax.jit, static_argnames=("tile_rows", "fold"))
def classification_head(z, w1, b1, w2, b2, *, tile_rows=16384, fold=4):
    """z: (B, 64); w1: (64, 16); b1: (16,); w2: (16, 3); b2: (3,).

    Weights are stored pre-transposed as (in, out), so this computes
    z @ w1 + b1 then @ w2 + b2 — identical to PyTorch's x @ W.T + b.
    The two affine layers are fused into one (64, 3) matmul (exact: there is
    no nonlinearity between them).
    """
    B, K = z.shape
    out_dim = w2.shape[1]

    # Exact algebraic fusion, computed in f32 (avoids double rounding if z
    # is ever bf16).
    w_fused = jnp.dot(w1.astype(jnp.float32), w2.astype(jnp.float32))          # (64, 3)
    b_fused = jnp.dot(b1.astype(jnp.float32), w2.astype(jnp.float32)) \
        + b2.astype(jnp.float32)                                               # (3,)

    # Row-fold factor: largest of {fold, 4, 2, 1} that divides B.
    F = 1
    for f in (fold, 4, 2):
        if 1 <= f <= fold and B % f == 0:
            F = f
            break
    Bf, Kf, Of = B // F, K * F, out_dim * F

    zf = z.reshape(Bf, Kf)                                        # free, contiguous
    w_bd = jnp.kron(jnp.eye(F, dtype=jnp.float32), w_fused)       # (Kf, Of) block-diag
    w_bd = w_bd.astype(z.dtype)                                   # match MXU input dtype
    b_bd = jnp.tile(b_fused, F).reshape(1, Of)                    # f32; added post-accumulate

    # Sublane granularity: 8 for 4-byte dtypes, 16 for 2-byte (bf16 pack).
    sub = 16 if jnp.dtype(z.dtype).itemsize == 2 else 8

    tile_f = max(tile_rows // F, sub)          # folded rows per grid step (target)
    if Bf <= tile_f:
        eff_tile = Bf                          # single block covering the whole batch
    else:
        eff_tile = _round_up(tile_f, sub)      # ragged last block handled by cdiv grid

    grid = (pl.cdiv(Bf, eff_tile),)

    out = pl.pallas_call(
        _head_kernel,
        out_shape=jax.ShapeDtypeStruct((Bf, Of), z.dtype),
        grid=grid,
        in_specs=[
            pl.BlockSpec((eff_tile, Kf), lambda i: (i, 0)),   # z tiles (pipelined)
            pl.BlockSpec((Kf, Of), lambda i: (0, 0)),         # fused block-diag weight
            pl.BlockSpec((1, Of), lambda i: (0, 0)),          # fused bias
        ],
        out_specs=pl.BlockSpec((eff_tile, Of), lambda i: (i, 0)),
        compiler_params=pltpu.CompilerParams(
            dimension_semantics=("parallel",),                # megacore on v7x
            vmem_limit_bytes=32 * 1024 * 1024,                # safe headroom on v5e too
        ),
    )(zf, w_bd, b_bd)

    return out.reshape(B, out_dim)


def init_params(key):
    """Deterministic synthetic init matching nn.Linear shapes.

    PyTorch stores Linear weight as (out, in); we store the transpose
    (in, out) so the kernel does a plain matmul.
    """
    k1, k2, k3, k4 = jax.random.split(key, 4)
    bound1 = 1.0 / jnp.sqrt(64.0)
    bound2 = 1.0 / jnp.sqrt(16.0)
    w1 = jax.random.uniform(k1, (64, 16), jnp.float32, -bound1, bound1)
    b1 = jax.random.uniform(k2, (16,), jnp.float32, -bound1, bound1)
    w2 = jax.random.uniform(k3, (16, 3), jnp.float32, -bound2, bound2)
    b2 = jax.random.uniform(k4, (3,), jnp.float32, -bound2, bound2)
    return w1, b1, w2, b2


if __name__ == "__main__":
    key = jax.random.PRNGKey(0)
    kz1, kz2, kz3, kp = jax.random.split(key, 4)
    w1, b1, w2, b2 = init_params(kp)

    def ref_fn(z):
        return (z @ w1 + b1) @ w2 + b2

    # Small batch: F=4 fold, single block.
    B = 8
    z = jax.random.normal(kz1, (B, 64), jnp.float32)
    out = classification_head(z, w1, b1, w2, b2)
    jax.block_until_ready(out)
    assert out.shape == (B, 3)
    assert jnp.allclose(out, ref_fn(z), atol=1e-4, rtol=1e-4)

    # Batch not a multiple of 8 (multiple of 4 -> F=4, Bf=25, single block).
    B2 = 100
    z2 = jax.random.normal(kz2, (B2, 64), jnp.float32)
    out2 = classification_head(z2, w1, b1, w2, b2)
    jax.block_until_ready(out2)
    assert out2.shape == (B2, 3)
    assert jnp.allclose(out2, ref_fn(z2), atol=1e-4, rtol=1e-4)

    # Same batch with a tiny tile to exercise the multi-step grid with a
    # ragged (cdiv-padded) last block.
    out2b = classification_head(z2, w1, b1, w2, b2, tile_rows=32)
    jax.block_until_ready(out2b)
    assert jnp.allclose(out2b, ref_fn(z2), atol=1e-4, rtol=1e-4)

    # Odd batch: fold falls back to F=1, single full-array block.
    B3 = 7
    z3 = jax.random.normal(kz3, (B3, 64), jnp.float32)
    out3 = classification_head(z3, w1, b1, w2, b2)
    jax.block_until_ready(out3)
    assert out3.shape == (B3, 3)
    assert jnp.allclose(out3, ref_fn(z3), atol=1e-4, rtol=1e-4)

    print("KERNEL_OK")
</pallas_src>

<mosaic_0001>
module attributes {stable_mosaic.version = 11 : i64} {
  func.func @_head_kernel(%arg0: i32, %arg1: memref<2x256xf32, #tpu.memory_space<vmem>>, %arg2: memref<256x12xf32, #tpu.memory_space<vmem>>, %arg3: memref<1x12xf32, #tpu.memory_space<vmem>>, %arg4: memref<2x12xf32, #tpu.memory_space<vmem>>) attributes {dimension_semantics = [#tpu.dimension_semantics<parallel>], iteration_bounds = array<i64: 1>, scalar_prefetch = 0 : i64, scratch_operands = 0 : i64, tpu.core_type = #tpu.core_type<tc>, window_params = [{transform_indices = @transform_0, window_bounds = array<i64: 2, 256>}, {pipeline_mode = #tpu.pipeline_mode<synchronous>, transform_indices = @transform_1, window_bounds = array<i64: 256, 12>}, {pipeline_mode = #tpu.pipeline_mode<synchronous>, transform_indices = @transform_2, window_bounds = array<i64: 1, 12>}, {transform_indices = @transform_3, window_bounds = array<i64: 2, 12>}]} {
    %c0 = arith.constant 0 : index
    %c0_0 = arith.constant 0 : index
    %0 = vector.load %arg1[%c0, %c0_0] : memref<2x256xf32, #tpu.memory_space<vmem>>, vector<2x256xf32>
    %c0_1 = arith.constant 0 : index
    %c0_2 = arith.constant 0 : index
    %1 = vector.load %arg2[%c0_1, %c0_2] : memref<256x12xf32, #tpu.memory_space<vmem>>, vector<256x12xf32>
    %cst = arith.constant dense<0.000000e+00> : vector<2x12xf32>
    %2 = tpu.matmul %0, %1, %cst {dimension_numbers = #tpu.dot_dimension_numbers<[1], [0], [0], [1], [0, 0, 1, 1], [], []>} : vector<2x256xf32>, vector<256x12xf32>, vector<2x12xf32> -> vector<2x12xf32>
    %c0_3 = arith.constant 0 : index
    %c0_4 = arith.constant 0 : index
    %3 = vector.load %arg3[%c0_3, %c0_4] : memref<1x12xf32, #tpu.memory_space<vmem>>, vector<1x12xf32>
    %4 = vector.broadcast %3 : vector<1x12xf32> to vector<2x12xf32>
    %5 = arith.addf %2, %4 : vector<2x12xf32>
    %c0_5 = arith.constant 0 : index
    %c0_6 = arith.constant 0 : index
    %6 = vector.load %arg4[%c0_5, %c0_6] : memref<2x12xf32, #tpu.memory_space<vmem>>, vector<2x12xf32>
    tpu.vector_store %arg4[%c0_5, %c0_6], %5 {strides = array<i32>} : memref<2x12xf32, #tpu.memory_space<vmem>>, vector<2x12xf32>,
    return
  }
  func.func @transform_0(%arg0: i32) -> (i32, i32) {
    %c0_i32 = arith.constant 0 : i32
    %c0_i32_0 = arith.constant 0 : i32
    return %arg0, %c0_i32 : i32, i32
  }
  func.func @transform_1(%arg0: i32) -> (i32, i32) {
    %c0_i32 = arith.constant 0 : i32
    %c0_i32_0 = arith.constant 0 : i32
    %c0_i32_1 = arith.constant 0 : i32
    return %c0_i32, %c0_i32_0 : i32, i32
  }
  func.func @transform_2(%arg0: i32) -> (i32, i32) {
    %c0_i32 = arith.constant 0 : i32
    %c0_i32_0 = arith.constant 0 : i32
    %c0_i32_1 = arith.constant 0 : i32
    return %c0_i32, %c0_i32_0 : i32, i32
  }
  func.func @transform_3(%arg0: i32) -> (i32, i32) {
    %c0_i32 = arith.constant 0 : i32
    %c0_i32_0 = arith.constant 0 : i32
    return %arg0, %c0_i32 : i32, i32
  }
}

</mosaic_0001>

<llo_original>
// kernel: tile.8
$region0: #{tile.8}
  #allocation0 [shape = 's32[1]{0}', space=sflag, size = 0x4, scoped, tag = 'scoped memory for tile.8']
  %s0 = inlined_call_operand.vmem [shape: f32[3], index: 0, kind: input, shape index: {}]
  %s1 = inlined_call_operand.vmem [shape: f32[4,3], index: 1, kind: output, shape index: {}]
  // Predicated region
  $region2: #{tile.8} parent=0 // pred_check
    _
  $region3: #{tile.8} parent=0 // pred_check_branch
    %3 = sbr.rel (0) target = $region5
  $region4: #{tile.8} parent=0 // pred_region
    _
  $region5: #{tile.8} parent=0 // pred_fallthru
    _
  %v4 = vld [vmem:[%s0] ss:$0 sm:$0xff]
  %5 = vst [vmem:[%s1] sm:$0xf] %v4

// kernel: tile.9
$region0: #{tile.9}
  %s0 = inlined_call_operand.vmem [shape: f32[4,3], index: 0, kind: input, shape index: {}]
  %s1 = inlined_call_operand.vmem [shape: f32[1,12], index: 1, kind: output, shape index: {}]
  $region1: #{tile.9} parent=0
    #allocation0 [shape = 'u8[4096]{0}', space=vmem, size = 0x1000, scoped, tag = 'scoped mem for output reshape']
    #allocation1 [shape = 'u8[4096]{0}', space=vmem, size = 0x1000, scoped, tag = 'scoped mem for input reshape']
    %s3 = ssub.s32 16, 1
    %v4 = vld [vmem:[%s0] sm:%s3]
    %5 = vst [vmem:[#allocation1] sm:%s3] %v4
    %v6 = vld [vmem:[#allocation1] sm:$0x1]
    %vm7 = vcmask 23552
    %8 = vst.msk [vmem:[#allocation0] sm:$0x1] %vm7, %v6
    %s9 = scalar_lea.vmem [#allocation1], 3
    %v10 = vld [vmem:[%s9] sm:$0x1]
    %11 = vrot.lane.b32.xlu0 %v10, 9
    %v12 = vpop.permute.xlu0 %11
    %vm13 = vcmask 97352
    %14 = vst.msk [vmem:[#allocation0] sm:$0x1] %vm13, %v12
    %s15 = scalar_lea.vmem [#allocation1], 2
    %v16 = vld [vmem:[%s15] sm:$0x1]
    %17 = vrot.lane.b32.xlu0 %v16, 6
    %v18 = vpop.permute.xlu0 %17
    %vm19 = vcmask 72752
    %20 = vst.msk [vmem:[#allocation0] sm:$0x1] %vm19, %v18
    %s21 = scalar_lea.vmem [#allocation1], 1
    %v22 = vld [vmem:[%s21] sm:$0x1]
    %23 = vrot.lane.b32.xlu0 %v22, 3
    %v24 = vpop.permute.xlu0 %23
    %vm25 = vcmask 48152
    %26 = vst.msk [vmem:[#allocation0] sm:$0x1] %vm25, %v24
    %s28 = ssub.s32 2, 1
    %v29 = vld [vmem:[#allocation0] sm:%s28]
    %s31 = ssub.s32 2, 1
    %32 = vst [vmem:[%s1] sm:%s31] %v29

// kernel: classification_head.1
$region0: #{classification_head.1}
  #allocation0 [shape = 'u32[]', space=smem, size = 0x4, offset = 0x4, fixed_abs, tag = 'smem constant byte address 0x4 - core index']
  #allocation1 [shape = 'u32[72,128]{1,0:T(1,128)}', space=vmem, size = 0x9000, scoped, tag = 'internal scratch']
  %s0 = inlined_call_operand.vmem [shape: f32[2,256], index: 0, kind: input, shape index: {}]
  %s1 = inlined_call_operand.vmem [shape: f32[256,12], index: 1, kind: input, shape index: {}]
  %s2 = inlined_call_operand.vmem [shape: f32[1,12], index: 2, kind: input, shape index: {}]
  %s3 = inlined_call_operand.vmem [shape: f32[2,12], index: 3, kind: output, shape index: {}]
  %s4 = sld [smem:[#allocation0]]
  $region22: #{classification_head.1} parent=0
    _
  %s6 = ssub.s32 1, %s4
  %s7 = scalar_select 0, %s6, %s4
  // Predicated region
  $region2: #{classification_head.1} parent=0 // pred_check
    _
  $region3: #{classification_head.1} parent=0 // pred_check_branch
    %9 = sbr.rel (0) target = $region5
  $region4: #{classification_head.1} parent=0 // pred_region
    _
  $region5: #{classification_head.1} parent=0 // pred_fallthru
    _
  // Predicated region
  $region6: #{classification_head.1} parent=0 // pred_check
    _
  $region7: #{classification_head.1} parent=0 // pred_check_branch
    %11 = sbr.rel (0) target = $region9
  $region8: #{classification_head.1} parent=0 // pred_region
    _
  $region9: #{classification_head.1} parent=0 // pred_fallthru
    _
  // Predicated region
  $region10: #{classification_head.1} parent=0 // pred_check
    _
  $region11: #{classification_head.1} parent=0 // pred_check_branch
    %13 = sbr.rel (0) target = $region13
  $region12: #{classification_head.1} parent=0 // pred_region
    _
  $region13: #{classification_head.1} parent=0 // pred_fallthru
    _
  %v14 = vld [vmem:[%s0] sm:$0xf]
  %v15 = vld [vmem:[%s1] sm:$0xff]
  %v16 = vld [vmem:[%s1 + $0x8] sm:$0xff]
  %v17 = vld [vmem:[%s1 + $0x10] sm:$0xff]
  %v18 = vld [vmem:[%s1 + $0x18] sm:$0xff]
  %v19 = vld [vmem:[%s1 + $0x20] sm:$0xff]
  %v20 = vld [vmem:[%s1 + $0x28] sm:$0xff]
  %v21 = vld [vmem:[%s1 + $0x30] sm:$0xff]
  %v22 = vld [vmem:[%s1 + $0x38] sm:$0xff]
  %v23 = vld [vmem:[%s1 + $0x40] sm:$0xff]
  %v24 = vld [vmem:[%s1 + $0x48] sm:$0xff]
  %v25 = vld [vmem:[%s1 + $0x50] sm:$0xff]
  %v26 = vld [vmem:[%s1 + $0x58] sm:$0xff]
  %v27 = vld [vmem:[%s1 + $0x60] sm:$0xff]
  %v28 = vld [vmem:[%s1 + $0x68] sm:$0xff]
  %v29 = vld [vmem:[%s1 + $0x70] sm:$0xff]
  %v30 = vld [vmem:[%s1 + $0x78] sm:$0xff]
  %v31 = vld [vmem:[%s1 + $0x80] sm:$0xff]
  %v32 = vld [vmem:[%s1 + $0x88] sm:$0xff]
  %v33 = vld [vmem:[%s1 + $0x90] sm:$0xff]
  %v34 = vld [vmem:[%s1 + $0x98] sm:$0xff]
  %v35 = vld [vmem:[%s1 + $0xa0] sm:$0xff]
  %v36 = vld [vmem:[%s1 + $0xa8] sm:$0xff]
  %v37 = vld [vmem:[%s1 + $0xb0] sm:$0xff]
  %v38 = vld [vmem:[%s1 + $0xb8] sm:$0xff]
  %v39 = vld [vmem:[%s1 + $0xc0] sm:$0xff]
  %v40 = vld [vmem:[%s1 + $0xc8] sm:$0xff]
  %v41 = vld [vmem:[%s1 + $0xd0] sm:$0xff]
  %v42 = vld [vmem:[%s1 + $0xd8] sm:$0xff]
  %v43 = vld [vmem:[%s1 + $0xe0] sm:$0xff]
  %v44 = vld [vmem:[%s1 + $0xe8] sm:$0xff]
  %v45 = vld [vmem:[%s1 + $0xf0] sm:$0xff]
  %v46 = vld [vmem:[%s1 + $0xf8] sm:$0xff]
  %v47 = vld [vmem:[%s2] sm:$0x1]
  %v49 = vperm.slane %v47, 0
  %52 = vst [vmem:[#allocation1] ss:$4 sm:$0xff] %v14
  %v53 = vld.sshfl [vmem:[#allocation1] sm:$0xff pattern:$0x73625140]
  %v54 = vld.sshfl [vmem:[#allocation1 + $0x8] sm:$0xff pattern:$0x73625140]
  %57 = vmatpush.msra.mxu0 %v30
  %58 = vmatpush.msra.mxu0 %v29
  %59 = vmatpush.msra.mxu0 %v28
  %60 = vmatpush.msra.mxu0 %v27
  %61 = vmatpush.msra.mxu0 %v26
  %62 = vmatpush.msra.mxu0 %v25
  %63 = vmatpush.msra.mxu0 %v24
  %64 = vmatpush.msra.mxu0 %v23
  %65 = vmatpush.msra.mxu0 %v22
  %66 = vmatpush.msra.mxu0 %v21
  %67 = vmatpush.msra.mxu0 %v20
  %68 = vmatpush.msra.mxu0 %v19
  %69 = vmatpush.msra.mxu0 %v18
  %70 = vmatpush.msra.mxu0 %v17
  %71 = vmatpush.msra.mxu0 %v16
  %72 = vmatpush.msra.mxu0 %v15
  %73 = vmatmul.f32.gmra.mxu0 %v53
  %v74 = vpop.f32.mrf.mxu0
  %v75 = vadd.f32 %v49, %v74
  %76 = vdwg.mxu0
  %77 = vmatpush.msra.mxu0 %v46
  %78 = vmatpush.msra.mxu0 %v45
  %79 = vmatpush.msra.mxu0 %v44
  %80 = vmatpush.msra.mxu0 %v43
  %81 = vmatpush.msra.mxu0 %v42
  %82 = vmatpush.msra.mxu0 %v41
  %83 = vmatpush.msra.mxu0 %v40
  %84 = vmatpush.msra.mxu0 %v39
  %85 = vmatpush.msra.mxu0 %v38
  %86 = vmatpush.msra.mxu0 %v37
  %87 = vmatpush.msra.mxu0 %v36
  %88 = vmatpush.msra.mxu0 %v35
  %89 = vmatpush.msra.mxu0 %v34
  %90 = vmatpush.msra.mxu0 %v33
  %91 = vmatpush.msra.mxu0 %v32
  %92 = vmatpush.msra.mxu0 %v31
  %93 = vmatmul.f32.gmra.mxu0 %v54
  %v94 = vpop.f32.mrf.mxu0
  %v95 = vadd.f32 %v75, %v94
  %96 = vdwg.mxu0
  %vm97 = vcmask 91136
  %98 = vst.msk [vmem:[%s3] sm:$0x3] %vm97, %v95
  // Predicated region
  $region14: #{classification_head.1} parent=0 // pred_check
    _
  $region15: #{classification_head.1} parent=0 // pred_check_branch
    %100 = sbr.rel (0) target = $region17
  $region16: #{classification_head.1} parent=0 // pred_region
    _
  $region17: #{classification_head.1} parent=0 // pred_fallthru
    _
  // Predicated region
  $region18: #{classification_head.1} parent=0 // pred_check
    _
  $region19: #{classification_head.1} parent=0 // pred_check_branch
    %102 = sbr.rel (0) target = $region21
  $region20: #{classification_head.1} parent=0 // pred_region
    _
  $region21: #{classification_head.1} parent=0 // pred_fallthru
    _

</llo_original>
